<compile_context>
chip_gen: v7x
topology: tpu7x:2x2x1
jax: 0.10.0
libtpu: 0.0.40
codegen_flags: <defaults>
</compile_context>

<pallas_src>
import jax
import jax.numpy as jnp
from jax import lax
from jax.experimental import pallas as pl
from jax.experimental.pallas import tpu as pltpu


def _part_attention_kernel(row_ref, x_ref, val_ref, idx_ref, carry_ref):
    # row_ref  : (Gb, 1, S)  — CLS row of layer L-1 for this head group.
    # x_ref    : (Gb, S, S)  — attention map of layer L-2-l (native dtype).
    # val_ref  : (1, Gb, 1) f32    idx_ref: (1, Gb, 1) int32
    # carry_ref: (Gb, 8, S) f32 scratch — running CLS row (row 0 is real,
    #            rows 1..7 are redundant copies forming a full sublane tile).
    l = pl.program_id(1)
    n_steps = pl.num_programs(1)

    @pl.when(l == 0)
    def _init():
        row0 = row_ref[...].astype(jnp.float32)                   # (Gb, 1, S)
        carry_ref[...] = jnp.broadcast_to(row0, carry_ref.shape)  # (Gb, 8, S)

    # Every grid step multiplies the running CLS row by one more layer:
    #   row0(A @ B) == row0(A) @ B.
    # The layer block stays in its native dtype (no full-block f32 copy);
    # only the tiny carry is cast when dtypes differ. Accumulation is f32.
    x = x_ref[...]                                                 # (Gb, S, S)
    carry = carry_ref[...]                                         # (Gb, 8, S)
    if carry.dtype != x.dtype:
        carry = carry.astype(x.dtype)
    carry_ref[...] = jnp.einsum("hrs,hsk->hrk", carry, x,
                                preferred_element_type=jnp.float32)

    @pl.when(l == n_steps - 1)
    def _finalize():
        row = carry_ref[:, 0:1, :]                                 # (Gb, 1, S)
        S = row.shape[-1]
        col = lax.broadcasted_iota(jnp.int32, row.shape, 2)
        neg_inf = jnp.finfo(jnp.float32).min
        masked = jnp.where(col >= 1, row, neg_inf)                 # drop CLS col
        max_val = jnp.max(masked, axis=2)                          # (Gb, 1)
        # First-occurrence argmax (matches torch/jnp tie-breaking), shifted by
        # -1 because PyTorch indexes into the [1:] slice.
        idx_cand = jnp.where(masked == max_val[:, :, None], col, jnp.int32(S))
        max_idx = jnp.min(idx_cand, axis=2) - 1                    # (Gb, 1)
        val_ref[...] = max_val[None, :, :]                         # (1, Gb, 1)
        idx_ref[...] = max_idx[None, :, :]


def _round_up(a, m):
    return (a + m - 1) // m * m


def _padded_step_bytes(gb, S, itemsize):
    """Honest (padded) per-step VMEM footprint for a head group of size gb."""
    sub = {4: 8, 2: 16, 1: 32}.get(itemsize, 8)   # sublane tile per dtype
    s_sub = _round_up(S, sub)
    s_lane = _round_up(S, 128)
    return gb * (
        2 * s_sub * s_lane * itemsize      # double-buffered (gb, S, S) layer block
        + 2 * sub * s_lane * itemsize      # double-buffered (gb, 1, S) CLS-row block
        + 8 * s_lane * 4                   # (gb, 8, S) f32 carry scratch
    )


def _plan_tiling(BH, S, dtype):
    """Pick the head-group size Gb and the vmem_limit_bytes to request.

    Budget is a fraction of physical VMEM (v5e/v6e: 128 MiB -> 48 MiB budget,
    v7x: 64 MiB -> 24 MiB budget) so each DMA step is >= ~1-2 MiB (amortizes
    the ~0.35 us fixed per-step cost) while leaving room for compiler scratch.
    Gb is additionally capped at BH//2 so the 'parallel' grid axis has >= 2
    steps and both v7x TensorCores stay busy.
    """
    itemsize = jnp.dtype(dtype).itemsize
    try:
        cap = int(pltpu.get_tpu_info().vmem_capacity_bytes)
    except Exception:
        cap = 64 << 20                               # conservative (v7x-sized) fallback
    budget = int(min(cap * 0.375, 48 << 20))

    per_group = _padded_step_bytes(1, S, itemsize)
    gb = max(1, min(BH, budget // max(per_group, 1)))
    if BH >= 2:
        gb = min(gb, BH // 2)
    while BH % gb:
        gb -= 1

    footprint = _padded_step_bytes(gb, S, itemsize)
    vmem_limit = int(min(max(32 << 20, footprint + (8 << 20)), int(cap * 0.9)))
    return gb, vmem_limit


def part_attention(x):
    """TransFG Part_Attention forward.

    x: pre-stacked array [L, B, H, S, S] (preferred), or a list/tuple of L
       arrays [B, H, S, S] (PyTorch-style; incurs one extra HBM pass to stack).
    Returns (values [B, H] float32, indices [B, H] int32).
    """
    if isinstance(x, (list, tuple)):
        # TODO(synk): producers should pass the pre-stacked [L,B,H,S,S] array;
        # stacking here costs one extra HBM read+write of all inputs.
        x = jnp.stack(x, axis=0)
    L, B, H, S, S2 = x.shape
    assert S == S2

    if L == 1:
        # Degenerate case: no matmul chain at all; pure JAX is optimal.
        row = x[0, :, :, 0, 1:]
        return jnp.max(row, axis=2), jnp.argmax(row, axis=2).astype(jnp.int32)

    BH = B * H
    xf = x.reshape(L, BH, S, S)                  # free dim-merge reshape
    row_last = xf[L - 1, :, 0:1, :]              # (BH, 1, S): CLS row of layer L-1

    Gb, vmem_limit = _plan_tiling(BH, S, x.dtype)
    G = BH // Gb
    n_steps = L - 1                              # layers L-2 .. 0 are streamed

    val, idx = pl.pallas_call(
        _part_attention_kernel,
        grid=(G, n_steps),
        in_specs=[
            # CLS row of the last layer: resident across the layer axis.
            pl.BlockSpec((Gb, 1, S), lambda g, l: (g, 0, 0)),
            # One (Gb, S, S) layer block per step, reverse layer order L-2..0.
            # (For v7x, optionally sweep pipeline_mode=pl.Buffered(3) here.)
            pl.BlockSpec((pl.Squeezed(), Gb, S, S),
                         lambda g, l: (L - 2 - l, g, 0, 0)),
        ],
        out_specs=(
            pl.BlockSpec((1, Gb, 1), lambda g, l: (g, 0, 0)),
            pl.BlockSpec((1, Gb, 1), lambda g, l: (g, 0, 0)),
        ),
        out_shape=(
            jax.ShapeDtypeStruct((G, Gb, 1), jnp.float32),
            jax.ShapeDtypeStruct((G, Gb, 1), jnp.int32),
        ),
        scratch_shapes=[pltpu.VMEM((Gb, 8, S), jnp.float32)],
        compiler_params=pltpu.CompilerParams(
            dimension_semantics=("parallel", "arbitrary"),
            vmem_limit_bytes=vmem_limit),
    )(row_last, xf)

    return val.reshape(B, H), idx.reshape(B, H)


def _reference(x_list):
    last_map = x_list[0]
    for i in range(1, len(x_list)):
        last_map = jnp.einsum("bhij,bhjk->bhik", x_list[i], last_map)
    row = last_map[:, :, 0, 1:]
    return jnp.max(row, axis=2), jnp.argmax(row, axis=2).astype(jnp.int32)


if __name__ == "__main__":
    L, B, H, S = 4, 2, 4, 16
    key = jax.random.PRNGKey(0)
    keys = jax.random.split(key, L)
    # Softmax-normalized maps to mimic attention matrices.
    x_list = [jax.nn.softmax(jax.random.normal(k, (B, H, S, S), jnp.float32),
                             axis=-1) for k in keys]
    x_stacked = jnp.stack(x_list, axis=0)   # preferred pre-stacked input form

    vals, idxs = part_attention(x_stacked)
    vals = jax.block_until_ready(vals)
    idxs = jax.block_until_ready(idxs)

    ref_vals, ref_idxs = _reference(x_list)
    assert vals.shape == (B, H) and idxs.shape == (B, H)
    assert jnp.allclose(vals, ref_vals, rtol=1e-5, atol=1e-5)
    assert jnp.array_equal(idxs, ref_idxs)

    print("KERNEL_OK")
</pallas_src>

<mosaic_0001>
module attributes {stable_mosaic.version = 11 : i64} {
  func.func @_part_attention_kernel(%arg0: i32, %arg1: i32, %arg2: memref<4x1x16xf32, #tpu.memory_space<vmem>>, %arg3: memref<1x4x16x16xf32, #tpu.memory_space<vmem>>, %arg4: memref<1x4x1xf32, #tpu.memory_space<vmem>>, %arg5: memref<1x4x1xi32, #tpu.memory_space<vmem>>, %arg6: memref<4x8x16xf32, #tpu.memory_space<vmem>>) attributes {dimension_semantics = [#tpu.dimension_semantics<parallel>, #tpu.dimension_semantics<arbitrary>], iteration_bounds = array<i64: 2, 3>, scalar_prefetch = 0 : i64, scratch_operands = 1 : i64, tpu.core_type = #tpu.core_type<tc>, window_params = [{transform_indices = @transform_0, window_bounds = array<i64: 4, 1, 16>}, {transform_indices = @transform_1, window_bounds = array<i64: 1, 4, 16, 16>}, {transform_indices = @transform_2, window_bounds = array<i64: 1, 4, 1>}, {transform_indices = @transform_3, window_bounds = array<i64: 1, 4, 1>}]} {
    %c0_i32 = arith.constant 0 : i32
    %0 = arith.cmpi eq, %arg1, %c0_i32 : i32
    %1 = arith.extui %0 : i1 to i32
    %c0_i32_0 = arith.constant 0 : i32
    %2 = arith.cmpi ne, %1, %c0_i32_0 : i32
    scf.if %2 {
      %c0_11 = arith.constant 0 : index
      %c0_12 = arith.constant 0 : index
      %c0_13 = arith.constant 0 : index
      %11 = vector.load %arg2[%c0_11, %c0_12, %c0_13] : memref<4x1x16xf32, #tpu.memory_space<vmem>>, vector<4x1x16xf32>
      %12 = vector.shape_cast %11 : vector<4x1x16xf32> to vector<4x1x16xf32>
      %13 = vector.broadcast %12 : vector<4x1x16xf32> to vector<4x8x16xf32>
      %c0_14 = arith.constant 0 : index
      %c0_15 = arith.constant 0 : index
      %c0_16 = arith.constant 0 : index
      %14 = vector.load %arg6[%c0_14, %c0_15, %c0_16] : memref<4x8x16xf32, #tpu.memory_space<vmem>>, vector<4x8x16xf32>
      tpu.vector_store %arg6[%c0_14, %c0_15, %c0_16], %13 {strides = array<i32>} : memref<4x8x16xf32, #tpu.memory_space<vmem>>, vector<4x8x16xf32>,
    } else {
    }
    %c0 = arith.constant 0 : index
    %c0_1 = arith.constant 0 : index
    %c0_2 = arith.constant 0 : index
    %c0_3 = arith.constant 0 : index
    %3 = vector.load %arg3[%c0, %c0_1, %c0_2, %c0_3] : memref<1x4x16x16xf32, #tpu.memory_space<vmem>>, vector<1x4x16x16xf32>
    %4 = vector.shape_cast %3 : vector<1x4x16x16xf32> to vector<4x16x16xf32>
    %c0_4 = arith.constant 0 : index
    %c0_5 = arith.constant 0 : index
    %c0_6 = arith.constant 0 : index
    %5 = vector.load %arg6[%c0_4, %c0_5, %c0_6] : memref<4x8x16xf32, #tpu.memory_space<vmem>>, vector<4x8x16xf32>
    "tpu.trace_start"() <{level = 10 : i32, message = "hrs,hsk->hrk"}> : () -> ()
    %cst = arith.constant dense<0.000000e+00> : vector<4x8x16xf32>
    %6 = tpu.matmul %5, %4, %cst {dimension_numbers = #tpu.dot_dimension_numbers<[2], [1], [1], [2], [0, 0, 0, 1, 1, 2], [0], [0]>} : vector<4x8x16xf32>, vector<4x16x16xf32>, vector<4x8x16xf32> -> vector<4x8x16xf32>
    "tpu.trace_stop"() : () -> ()
    %c0_7 = arith.constant 0 : index
    %c0_8 = arith.constant 0 : index
    %c0_9 = arith.constant 0 : index
    %7 = vector.load %arg6[%c0_7, %c0_8, %c0_9] : memref<4x8x16xf32, #tpu.memory_space<vmem>>, vector<4x8x16xf32>
    tpu.vector_store %arg6[%c0_7, %c0_8, %c0_9], %6 {strides = array<i32>} : memref<4x8x16xf32, #tpu.memory_space<vmem>>, vector<4x8x16xf32>,
    %c2_i32 = arith.constant 2 : i32
    %8 = arith.cmpi eq, %arg1, %c2_i32 : i32
    %9 = arith.extui %8 : i1 to i32
    %c0_i32_10 = arith.constant 0 : i32
    %10 = arith.cmpi ne, %9, %c0_i32_10 : i32
    scf.if %10 {
      %c0_11 = arith.constant 0 : index
      %c0_12 = arith.constant 0 : index
      %c0_13 = arith.constant 0 : index
      %11 = vector.load %arg6[%c0_11, %c0_12, %c0_13] : memref<4x8x16xf32, #tpu.memory_space<vmem>>, vector<4x1x16xf32>
      %12 = tpu.iota {dimensions = array<i32: 2>} : vector<4x1x16xi32>
      %c1_i32 = arith.constant 1 : i32
      %13 = vector.broadcast %c1_i32 : i32 to vector<4x1x16xi32>
      %14 = arith.cmpi sge, %12, %13 : vector<4x1x16xi32>
      %cst_14 = arith.constant -3.40282347E+38 : f32
      %15 = vector.broadcast %cst_14 : f32 to vector<4x1x16xf32>
      %16 = arith.select %14, %11, %15 : vector<4x1x16xi1>, vector<4x1x16xf32>
      %cst_15 = arith.constant dense<0xFF800000> : vector<4x1xf32>
      %17 = vector.multi_reduction <maximumf>, %16, %cst_15 [2] : vector<4x1x16xf32> to vector<4x1xf32>
      %18 = vector.shape_cast %17 : vector<4x1xf32> to vector<4x1x1xf32>
      %19 = vector.broadcast %18 : vector<4x1x1xf32> to vector<4x1x16xf32>
      %20 = arith.cmpf oeq, %16, %19 : vector<4x1x16xf32>
      %c16_i32 = arith.constant 16 : i32
      %21 = vector.broadcast %c16_i32 : i32 to vector<4x1x16xi32>
      %22 = arith.select %20, %12, %21 : vector<4x1x16xi1>, vector<4x1x16xi32>
      %cst_16 = arith.constant dense<2147483647> : vector<4x1xi32>
      %23 = vector.multi_reduction <minsi>, %22, %cst_16 [2] : vector<4x1x16xi32> to vector<4x1xi32>
      %c1_i32_17 = arith.constant 1 : i32
      %24 = vector.broadcast %c1_i32_17 : i32 to vector<4x1xi32>
      %25 = arith.subi %23, %24 : vector<4x1xi32>
      %26 = vector.shape_cast %17 : vector<4x1xf32> to vector<1x4x1xf32>
      %c0_18 = arith.constant 0 : index
      %c0_19 = arith.constant 0 : index
      %c0_20 = arith.constant 0 : index
      %27 = vector.load %arg4[%c0_18, %c0_19, %c0_20] : memref<1x4x1xf32, #tpu.memory_space<vmem>>, vector<1x4x1xf32>
      tpu.vector_store %arg4[%c0_18, %c0_19, %c0_20], %26 {strides = array<i32>} : memref<1x4x1xf32, #tpu.memory_space<vmem>>, vector<1x4x1xf32>,
      %28 = vector.shape_cast %25 : vector<4x1xi32> to vector<1x4x1xi32>
      %c0_21 = arith.constant 0 : index
      %c0_22 = arith.constant 0 : index
      %c0_23 = arith.constant 0 : index
      %29 = vector.load %arg5[%c0_21, %c0_22, %c0_23] : memref<1x4x1xi32, #tpu.memory_space<vmem>>, vector<1x4x1xi32>
      tpu.vector_store %arg5[%c0_21, %c0_22, %c0_23], %28 {strides = array<i32>} : memref<1x4x1xi32, #tpu.memory_space<vmem>>, vector<1x4x1xi32>,
    } else {
    }
    return
  }
  func.func @transform_0(%arg0: i32, %arg1: i32) -> (i32, i32, i32) {
    %c0_i32 = arith.constant 0 : i32
    %c0_i32_0 = arith.constant 0 : i32
    %c0_i32_1 = arith.constant 0 : i32
    return %arg0, %c0_i32, %c0_i32_0 : i32, i32, i32
  }
  func.func @transform_1(%arg0: i32, %arg1: i32) -> (i32, i32, i32, i32) {
    %c2_i32 = arith.constant 2 : i32
    %0 = arith.subi %c2_i32, %arg1 : i32
    %c0_i32 = arith.constant 0 : i32
    %c0_i32_0 = arith.constant 0 : i32
    %c0_i32_1 = arith.constant 0 : i32
    return %0, %arg0, %c0_i32, %c0_i32_0 : i32, i32, i32, i32
  }
  func.func @transform_2(%arg0: i32, %arg1: i32) -> (i32, i32, i32) {
    %c0_i32 = arith.constant 0 : i32
    %c0_i32_0 = arith.constant 0 : i32
    %c0_i32_1 = arith.constant 0 : i32
    return %arg0, %c0_i32, %c0_i32_0 : i32, i32, i32
  }
  func.func @transform_3(%arg0: i32, %arg1: i32) -> (i32, i32, i32) {
    %c0_i32 = arith.constant 0 : i32
    %c0_i32_0 = arith.constant 0 : i32
    %c0_i32_1 = arith.constant 0 : i32
    return %arg0, %c0_i32, %c0_i32_0 : i32, i32, i32
  }
}

</mosaic_0001>

<llo_original>
// kernel: tpu_custom_call.1
$region0: #{tpu_custom_call.1}
  #allocation0 [shape = 'u32[]', space=smem, size = 0x4, offset = 0x4, fixed_abs, tag = 'smem constant byte address 0x4 - core index']
  #allocation1 [shape = 'u32[144,128]{1,0:T(1,128)}', space=vmem, size = 0x12000, scoped, tag = 'internal scratch']
  #allocation2 [shape = 'f32[4,8,16]{2,1,0:T(8,128)}', space=vmem, size = 0x4000, scoped, tag = 'scratch operand']
  %s0 = inlined_call_operand.hbm [shape: f32[8,1,16], index: 0, kind: input, shape index: {}]
  %s1 = inlined_call_operand.hbm [shape: f32[4,8,16,16], index: 1, kind: input, shape index: {}]
  %s2 = inlined_call_operand.vmem [shape: f32[2,4,1], index: 2, kind: output, shape index: {0}]
  %s3 = inlined_call_operand.vmem [shape: s32[2,4,1], index: 3, kind: output, shape index: {1}]
  %4 = xla_tuple %s2, %s3
  %s5 = sld [smem:[#allocation0]]
  $region65: #{tpu_custom_call.1} parent=0
    _
  %s7 = ssub.s32 1, %s5
  %s8 = scalar_select 0, %s7, %s5
  $region1: #{tpu_custom_call.1} parent=0
    #allocation3 [shape = 'u8[4096]{0}', space=vmem, size = 0x1000, scoped, tag = 'input window, operand 0']
    #allocation4 [shape = 's32[2]{0}', space=sflag, size = 0x8, scoped, tag = 'scoped memory for tpu_custom_call.1']
    #allocation5 [shape = 'u8[65536]{0}', space=vmem, size = 0x10000, scoped, tag = 'input window, operand 1']
    #allocation6 [shape = 's32[2]{0}', space=sflag, size = 0x8, scoped, tag = 'scoped memory for tpu_custom_call.1']
    %9 = vsyncpa [#allocation4], 0
    %s10 = scalar_lea.sflag [#allocation4], 1
    %11 = vsyncpa %s10, 0
    %12 = vsyncpa [#allocation6], 0
    %s13 = scalar_lea.sflag [#allocation6], 1
    %14 = vsyncpa %s13, 0
    loop: start=0, step=1, limit=8
    $region2: #{tpu_custom_call.1} parent=1 // loop_pre_header
      _
    $region3: #{tpu_custom_call.1} parent=1 // loop_header
      %s16 = sphi 0, %s20
      %p17 = scmp.ge.s32.totalorder %s16, 8
      %s23 = sphi 0, %s35
      %s24 = sphi 0, %s31
      %s25 = sphi 0, %s23
      %s26 = sphi 0, %s24
      %s27 = sphi 0, %s25
      %s28 = sphi 0, %s26
      %s38 = sphi 0, %s40
      %s41 = sphi 0, %s38
      %s42 = sphi 0, %s41
      %s58 = sphi 0, %s42
      %s68 = sphi 0, %s70
      %s71 = sphi 0, %s68
      %s72 = sphi 0, %s71
      %s88 = sphi 0, %s72
      %s94 = sphi 0, %s96
      %s97 = sphi 0, %s94
      %s98 = sphi 0, %s97
      %s114 = sphi 0, %s98
      %s120 = sphi 0, %s122
      %s123 = sphi 0, %s120
      %s124 = sphi 0, %s123
      %s140 = sphi 0, %s124
    $region4: #{tpu_custom_call.1} parent=1 // loop_header_branch
      %19 = sbr.rel (%p17) target = $region8
    $region5: #{tpu_custom_call.1} parent=1 // loop_body
      %s21 = ssub.s32 %s16, 1
      %s22 = ssub.s32 %s16, 2
      %s29 = sadd.s32 1, %s24
      %p30 = scmp.ge.s32.totalorder %s29, 3
      %s31 = scalar_select %p30, 0, %s29
      %s32 = sadd.s32 1, %s23
      %s33 = scalar_select %p30, %s32, %s23
      %p34 = scmp.ge.s32.totalorder %s33, 2
      %s35 = scalar_select %p34, 0, %s33
      %s36 = ssub.s32 %s23, %s35
      %p37 = scmp.eq.s32.totalorder %s36, 0
      %s39 = sadd.s32 %s38, 1
      %s40 = scalar_select %p37, %s38, %s39
      %p43 = pneg %p37
      %p44 = scmp.eq.s32.totalorder %s16, 5
      %p45 = por %p43, %p44
      %p46 = scmp.ne.s32.totalorder %s38, %s41
      %p47 = scmp.eq.s32.totalorder %s16, 0
      %p48 = por %p46, %p47
      %p49 = scmp.ne.s32.totalorder %s38, %s41
      %p50 = scmp.eq.s32.totalorder %s21, 5
      %p51 = por %p49, %p50
      %p52 = scmp.ne.s32.totalorder %s41, %s42
      %p53 = scmp.eq.s32.totalorder %s21, 0
      %p54 = por %p52, %p53
      %p55 = scmp.ne.s32.totalorder %s41, %s42
      %p56 = scmp.eq.s32.totalorder %s22, 5
      %p57 = por %p55, %p56
      %p59 = scmp.ne.s32.totalorder %s42, %s58
      %p60 = scmp.eq.s32.totalorder %s22, 0
      %p61 = por %p59, %p60
      %s62 = ssub.s32 2, %s24
      %s63 = ssub.s32 2, %s31
      %s64 = ssub.s32 %s62, %s63
      %s65 = ssub.s32 %s23, %s35
      %s66 = sor.u32 %s64, %s65
      %p67 = scmp.eq.s32.totalorder %s66, 0
      %s69 = sadd.s32 %s68, 1
      %s70 = scalar_select %p67, %s68, %s69
      %p73 = pneg %p67
      %p74 = scmp.eq.s32.totalorder %s16, 5
      %p75 = por %p73, %p74
      %p76 = scmp.ne.s32.totalorder %s68, %s71
      %p77 = scmp.eq.s32.totalorder %s16, 0
      %p78 = por %p76, %p77
      %p79 = scmp.ne.s32.totalorder %s68, %s71
      %p80 = scmp.eq.s32.totalorder %s21, 5
      %p81 = por %p79, %p80
      %p82 = scmp.ne.s32.totalorder %s71, %s72
      %p83 = scmp.eq.s32.totalorder %s21, 0
      %p84 = por %p82, %p83
      %p85 = scmp.ne.s32.totalorder %s71, %s72
      %p86 = scmp.eq.s32.totalorder %s22, 5
      %p87 = por %p85, %p86
      %p89 = scmp.ne.s32.totalorder %s72, %s88
      %p90 = scmp.eq.s32.totalorder %s22, 0
      %p91 = por %p89, %p90
      %s92 = ssub.s32 %s23, %s35
      %p93 = scmp.eq.s32.totalorder %s92, 0
      %s95 = sadd.s32 %s94, 1
      %s96 = scalar_select %p93, %s94, %s95
      %p99 = pneg %p93
      %p100 = scmp.eq.s32.totalorder %s16, 5
      %p101 = por %p99, %p100
      %p102 = scmp.ne.s32.totalorder %s94, %s97
      %p103 = scmp.eq.s32.totalorder %s16, 0
      %p104 = por %p102, %p103
      %p105 = scmp.ne.s32.totalorder %s94, %s97
      %p106 = scmp.eq.s32.totalorder %s21, 5
      %p107 = por %p105, %p106
      %p108 = scmp.ne.s32.totalorder %s97, %s98
      %p109 = scmp.eq.s32.totalorder %s21, 0
      %p110 = por %p108, %p109
      %p111 = scmp.ne.s32.totalorder %s97, %s98
      %p112 = scmp.eq.s32.totalorder %s22, 5
      %p113 = por %p111, %p112
      %p115 = scmp.ne.s32.totalorder %s98, %s114
      %p116 = scmp.eq.s32.totalorder %s22, 0
      %p117 = por %p115, %p116
      %s118 = ssub.s32 %s23, %s35
      %p119 = scmp.eq.s32.totalorder %s118, 0
      %s121 = sadd.s32 %s120, 1
      %s122 = scalar_select %p119, %s120, %s121
      %p125 = pneg %p119
      %p126 = scmp.eq.s32.totalorder %s16, 5
      %p127 = por %p125, %p126
      %p128 = scmp.ne.s32.totalorder %s120, %s123
      %p129 = scmp.eq.s32.totalorder %s16, 0
      %p130 = por %p128, %p129
      %p131 = scmp.ne.s32.totalorder %s120, %s123
      %p132 = scmp.eq.s32.totalorder %s21, 5
      %p133 = por %p131, %p132
      %p134 = scmp.ne.s32.totalorder %s123, %s124
      %p135 = scmp.eq.s32.totalorder %s21, 0
      %p136 = por %p134, %p135
      %p137 = scmp.ne.s32.totalorder %s123, %s124
      %p138 = scmp.eq.s32.totalorder %s22, 5
      %p139 = por %p137, %p138
      %p141 = scmp.ne.s32.totalorder %s124, %s140
      %p142 = scmp.eq.s32.totalorder %s22, 0
      %p143 = por %p141, %p142
      %p144 = scmp.le.s32.totalorder 1, %s16
      %p145 = scmp.lt.s32.totalorder %s16, 7
      %p146 = pnand %p144, %p145
      %p147 = pneg %p146
      // Predicated region
      $region9: #{tpu_custom_call.1} parent=5 // pred_check
        _
      $region10: #{tpu_custom_call.1} parent=5 // pred_check_branch
        %149 = sbr.rel (%p146) target = $region12
      $region11: #{tpu_custom_call.1} parent=5 // pred_region
        %s150 = ssub.s32 %s16, 1
      $region12: #{tpu_custom_call.1} parent=5 // pred_fallthru
        _
      %p151 = scmp.lt.s32.totalorder %s16, 6
      // Predicated region
      $region13: #{tpu_custom_call.1} parent=5 // pred_check
        %p152 = pneg %p151
      $region14: #{tpu_custom_call.1} parent=5 // pred_check_branch
        %154 = sbr.rel (%p152) target = $region16
      $region15: #{tpu_custom_call.1} parent=5 // pred_region
        // Predicated region
        $region17: #{tpu_custom_call.1} parent=15 // pred_check
          %p155 = pneg %p48
        $region18: #{tpu_custom_call.1} parent=15 // pred_check_branch
          %157 = sbr.rel (%p155) target = $region20
        $region19: #{tpu_custom_call.1} parent=15 // pred_region
          %s158 = sand.u32 %s38, 1
          %s159 = scalar_lea.sflag [#allocation4], %s158
          %s160 = sand.u32 %s38, 1
          %s161 = smul.addr %s160, 4
          %s162 = scalar_lea.vmem [#allocation3], %s161
          %s163 = smul.u32 4, %s23
          %s165 = ssub.s32 64, 64
          %166 = vsyncadd %s159, %s165
          %s167 = smul.addr %s163, 16
          %s168 = scalar_lea.hbm %s0, %s167
          %s169 = sshll.u32 %s162, 4
          %s170 = int_to_ptr.vmem [resolvable:$true] %s169
          %175 = dma.hbm_to_vmem [thread:$0]  %s168, 64, %s170, %s159, 16, 16, 1
        $region20: #{tpu_custom_call.1} parent=15 // pred_fallthru
          _
        // Predicated region
        $region21: #{tpu_custom_call.1} parent=15 // pred_check
          %p176 = pneg %p78
        $region22: #{tpu_custom_call.1} parent=15 // pred_check_branch
          %178 = sbr.rel (%p176) target = $region24
        $region23: #{tpu_custom_call.1} parent=15 // pred_region
          %s179 = sand.u32 %s68, 1
          %s180 = scalar_lea.sflag [#allocation6], %s179
          %s181 = sand.u32 %s68, 1
          %s182 = smul.addr %s181, 64
          %s183 = scalar_lea.vmem [#allocation5], %s182
          %s184 = ssub.s32 2, %s24
          %s185 = smul.u32 4, %s23
          %s187 = ssub.s32 1024, 1024
          %188 = vsyncadd %s180, %s187
          %s189 = smul.addr %s185, 2
          %s190 = smul.addr %s184, 16
          %s191 = sadd.s32 %s189, %s190
          %s192 = smul.addr %s191, 128
          %s193 = scalar_lea.hbm %s1, %s192
          %s194 = sshll.u32 %s183, 4
          %s195 = int_to_ptr.vmem [resolvable:$true] %s194
          %200 = dma.hbm_to_vmem [thread:$0]  %s193, 1024, %s195, %s180, 128, 128, 8
        $region24: #{tpu_custom_call.1} parent=15 // pred_fallthru
          _
      $region16: #{tpu_custom_call.1} parent=5 // pred_fallthru
        _
      %p201 = scmp.le.s32.totalorder 1, %s16
      %p202 = scmp.lt.s32.totalorder %s16, 7
      %p203 = pnand %p201, %p202
      %p204 = pneg %p203
      // Predicated region
      $region25: #{tpu_custom_call.1} parent=5 // pred_check
        _
      $region26: #{tpu_custom_call.1} parent=5 // pred_check_branch
        %206 = sbr.rel (%p203) target = $region28
      $region27: #{tpu_custom_call.1} parent=5 // pred_region
        %s207 = ssub.s32 %s16, 1
        %s208 = sand.u32 %s41, 1
        %s209 = scalar_lea.sflag [#allocation4], %s208
        %s210 = sand.u32 %s41, 1
        %s211 = smul.addr %s210, 4
        %s212 = scalar_lea.vmem [#allocation3], %s211
        // Predicated region
        $region29: #{tpu_custom_call.1} parent=27 // pred_check
          %p213 = pneg %p54
        $region30: #{tpu_custom_call.1} parent=27 // pred_check_branch
          %215 = sbr.rel (%p213) target = $region32
        $region31: #{tpu_custom_call.1} parent=27 // pred_region
          %216 = dma.done %s209, 64
        $region32: #{tpu_custom_call.1} parent=27 // pred_fallthru
          _
        %s217 = sand.u32 %s71, 1
        %s218 = scalar_lea.sflag [#allocation6], %s217
        %s219 = sand.u32 %s71, 1
        %s220 = smul.addr %s219, 64
        %s221 = scalar_lea.vmem [#allocation5], %s220
        // Predicated region
        $region33: #{tpu_custom_call.1} parent=27 // pred_check
          %p222 = pneg %p84
        $region34: #{tpu_custom_call.1} parent=27 // pred_check_branch
          %224 = sbr.rel (%p222) target = $region36
        $region35: #{tpu_custom_call.1} parent=27 // pred_region
          %225 = dma.done %s218, 1024
        $region36: #{tpu_custom_call.1} parent=27 // pred_fallthru
          _
        %s226 = sand.u32 %s41, 1
        %s227 = scalar_lea.sflag [#allocation4], %s226
        %s228 = sand.u32 %s41, 1
        %s229 = smul.addr %s228, 4
        %s230 = scalar_lea.vmem [#allocation3], %s229
        %p231 = pneg %p54
        %p232 = pneg %p51
        %s233 = sand.u32 %s71, 1
        %s234 = scalar_lea.sflag [#allocation6], %s233
        %s235 = sand.u32 %s71, 1
        %s236 = smul.addr %s235, 64
        %s237 = scalar_lea.vmem [#allocation5], %s236
        %p238 = pneg %p84
        %p239 = pneg %p81
        %p240 = pneg %p110
        %p241 = pneg %p107
        %p242 = scmp.lt.s32.totalorder %s25, 1
        %s243 = scalar_select %p242, %s25, 1
        %s244 = smul.addr %s243, 4
        %s245 = scalar_lea.vmem %s2, %s244
        %p246 = pneg %p136
        %p247 = pneg %p133
        %p248 = scmp.lt.s32.totalorder %s25, 1
        %s249 = scalar_select %p248, %s25, 1
        %s250 = smul.addr %s249, 4
        %s251 = scalar_lea.vmem %s3, %s250
        %s252 = smul.u32 4, %s25
        %s253 = ssub.s32 2, %s26
        %s254 = smul.u32 4, %s25
        %p255 = scmp.lt.s32.totalorder %s25, 1
        %s256 = scalar_select %p255, %s25, 1
        %s257 = smul.addr %s256, 4
        %s258 = scalar_lea.vmem %s2, %s257
        %p259 = scmp.lt.s32.totalorder %s25, 1
        %s260 = scalar_select %p259, %s25, 1
        %s261 = smul.addr %s260, 4
        %s262 = scalar_lea.vmem %s3, %s261
        %p263 = scmp.eq.s32.totalorder %s26, 0
        // Predicated region
        $region37: #{tpu_custom_call.1} parent=27 // pred_check
          %p264 = pneg %p263
        $region38: #{tpu_custom_call.1} parent=27 // pred_check_branch
          %266 = sbr.rel (%p264) target = $region40
        $region39: #{tpu_custom_call.1} parent=27 // pred_region
          %v267 = vld [vmem:[%s212] sm:$0x1]
          %v268 = vld [vmem:[%s212 + $0x1] sm:$0x1]
          %v269 = vld [vmem:[%s212 + $0x2] sm:$0x1]
          %v270 = vld [vmem:[%s212 + $0x3] sm:$0x1]
          %v275 = vlaneseq
          %v276 = vshrl.u32 %v275, 7
          %v277 = vsub.s32 0, %v276
          %v278 = vrot.slane %v267, %v277
          %v279 = vlaneseq
          %v280 = vshrl.u32 %v279, 7
          %v281 = vsub.s32 0, %v280
          %v282 = vrot.slane %v268, %v281
          %v283 = vlaneseq
          %v284 = vshrl.u32 %v283, 7
          %v285 = vsub.s32 0, %v284
          %v286 = vrot.slane %v269, %v285
          %v287 = vlaneseq
          %v288 = vshrl.u32 %v287, 7
          %v289 = vsub.s32 0, %v288
          %v290 = vrot.slane %v270, %v289
          %vm295 = vcmask 130048
          %296 = vst.msk [vmem:[#allocation2] sm:$0xff] %vm295, %v278
          %297 = vst.msk [vmem:[#allocation2 + $0x8] sm:$0xff] %vm295, %v282
          %298 = vst.msk [vmem:[#allocation2 + $0x10] sm:$0xff] %vm295, %v286
          %299 = vst.msk [vmem:[#allocation2 + $0x18] sm:$0xff] %vm295, %v290
        $region40: #{tpu_custom_call.1} parent=27 // pred_fallthru
          _
        %v300 = vld [vmem:[%s221] sm:$0xff]
        %v301 = vld [vmem:[%s221 + $0x8] sm:$0xff]
        %v302 = vld [vmem:[%s221 + $0x10] sm:$0xff]
        %v303 = vld [vmem:[%s221 + $0x18] sm:$0xff]
        %v304 = vld [vmem:[%s221 + $0x20] sm:$0xff]
        %v305 = vld [vmem:[%s221 + $0x28] sm:$0xff]
        %v306 = vld [vmem:[%s221 + $0x30] sm:$0xff]
        %v307 = vld [vmem:[%s221 + $0x38] sm:$0xff]
        %v308 = vld [vmem:[#allocation2] sm:$0xff]
        %v309 = vld [vmem:[#allocation2 + $0x8] sm:$0xff]
        %v310 = vld [vmem:[#allocation2 + $0x10] sm:$0xff]
        %v311 = vld [vmem:[#allocation2 + $0x18] sm:$0xff]
        %vm312 = vcmask 130048
        %v314 = vsel %vm312, %v308, 0
        %316 = vmatprep.subr.mxu0 0.0
        %317 = vmatpush1.msra.mxu0 %v300
        %318 = vmatprep.subr.mxu0 0.0
        %319 = vmatpush1.msra.mxu0 %v301
        %320 = vmatprep.subr.mxu0 0.0
        %321 = vmatpush1.msra.mxu0 0.0
        %322 = vmatprep.subr.mxu0 0.0
        %323 = vmatpush1.msra.mxu0 0.0
        %324 = vmatprep.subr.mxu0 0.0
        %325 = vmatpush1.msra.mxu0 0.0
        %326 = vmatprep.subr.mxu0 0.0
        %327 = vmatpush1.msra.mxu0 0.0
        %328 = vmatprep.subr.mxu0 0.0
        %329 = vmatpush1.msra.mxu0 0.0
        %330 = vmatprep.subr.mxu0 0.0
        %331 = vmatpush1.msra.mxu0 0.0
        %332 = vmatprep.subr.mxu0 0.0
        %333 = vmatpush1.msra.mxu0 0.0
        %334 = vmatprep.subr.mxu0 0.0
        %335 = vmatpush1.msra.mxu0 0.0
        %336 = vmatprep.subr.mxu0 0.0
        %337 = vmatpush1.msra.mxu0 0.0
        %338 = vmatprep.subr.mxu0 0.0
        %339 = vmatpush1.msra.mxu0 0.0
        %340 = vmatprep.subr.mxu0 0.0
        %341 = vmatpush1.msra.mxu0 0.0
        %342 = vmatprep.subr.mxu0 0.0
        %343 = vmatpush1.msra.mxu0 0.0
        %344 = vmatprep.subr.mxu0 0.0
        %345 = vmatpush1.msra.mxu0 0.0
        %346 = vmatprep.subr.mxu0 0.0
        %347 = vmatpush1.msra.mxu0 0.0
        %348 = vmatprep.subr.mxu0 0.0
        %349 = vmatpush1.msra.mxu0 0.0
        %350 = vmatprep.subr.mxu0 0.0
        %351 = vmatpush1.msra.mxu0 0.0
        %352 = vmatprep.subr.mxu0 0.0
        %353 = vmatpush1.msra.mxu0 0.0
        %354 = vmatprep.subr.mxu0 0.0
        %355 = vmatpush1.msra.mxu0 0.0
        %356 = vmatprep.subr.mxu0 0.0
        %357 = vmatpush1.msra.mxu0 0.0
        %358 = vmatprep.subr.mxu0 0.0
        %359 = vmatpush1.msra.mxu0 0.0
        %360 = vmatprep.subr.mxu0 0.0
        %361 = vmatpush1.msra.mxu0 0.0
        %362 = vmatprep.subr.mxu0 0.0
        %363 = vmatpush1.msra.mxu0 0.0
        %364 = vmatprep.subr.mxu0 0.0
        %365 = vmatpush1.msra.mxu0 0.0
        %366 = vmatprep.subr.mxu0 0.0
        %367 = vmatpush1.msra.mxu0 0.0
        %368 = vmatprep.subr.mxu0 0.0
        %369 = vmatpush1.msra.mxu0 0.0
        %370 = vmatprep.subr.mxu0 0.0
        %371 = vmatpush1.msra.mxu0 0.0
        %372 = vmatprep.subr.mxu0 0.0
        %373 = vmatpush1.msra.mxu0 0.0
        %374 = vmatprep.subr.mxu0 0.0
        %375 = vmatpush1.msra.mxu0 0.0
        %376 = vmatprep.subr.mxu0 0.0
        %377 = vmatpush1.msra.mxu0 0.0
        %378 = vmatprep.subr.mxu0 0.0
        %379 = vmatpush1.msra.mxu0 0.0
        %380 = vmatprep.mubr.f32.mxu0 0.0
        %381 = vmatmul.mubr.f32.gmra.mrb[0].mxu0 %v314
        %v382 = vpop.f32.mrb[0].mxu0
        %v383 = vadd.f32 0.0, %v382
        %v384 = vpop.f32.mrb[0].mxu0
        %385 = vdwg.mxu0
        %v387 = vsel %vm312, %v309, 0
        %389 = vmatprep.subr.mxu0 0.0
        %390 = vmatpush1.msra.mxu0 %v302
        %391 = vmatprep.subr.mxu0 0.0
        %392 = vmatpush1.msra.mxu0 %v303
        %393 = vmatprep.subr.mxu0 0.0
        %394 = vmatpush1.msra.mxu0 0.0
        %395 = vmatprep.subr.mxu0 0.0
        %396 = vmatpush1.msra.mxu0 0.0
        %397 = vmatprep.subr.mxu0 0.0
        %398 = vmatpush1.msra.mxu0 0.0
        %399 = vmatprep.subr.mxu0 0.0
        %400 = vmatpush1.msra.mxu0 0.0
        %401 = vmatprep.subr.mxu0 0.0
        %402 = vmatpush1.msra.mxu0 0.0
        %403 = vmatprep.subr.mxu0 0.0
        %404 = vmatpush1.msra.mxu0 0.0
        %405 = vmatprep.subr.mxu0 0.0
        %406 = vmatpush1.msra.mxu0 0.0
        %407 = vmatprep.subr.mxu0 0.0
        %408 = vmatpush1.msra.mxu0 0.0
        %409 = vmatprep.subr.mxu0 0.0
        %410 = vmatpush1.msra.mxu0 0.0
        %411 = vmatprep.subr.mxu0 0.0
        %412 = vmatpush1.msra.mxu0 0.0
        %413 = vmatprep.subr.mxu0 0.0
        %414 = vmatpush1.msra.mxu0 0.0
        %415 = vmatprep.subr.mxu0 0.0
        %416 = vmatpush1.msra.mxu0 0.0
        %417 = vmatprep.subr.mxu0 0.0
        %418 = vmatpush1.msra.mxu0 0.0
        %419 = vmatprep.subr.mxu0 0.0
        %420 = vmatpush1.msra.mxu0 0.0
        %421 = vmatprep.subr.mxu0 0.0
        %422 = vmatpush1.msra.mxu0 0.0
        %423 = vmatprep.subr.mxu0 0.0
        %424 = vmatpush1.msra.mxu0 0.0
        %425 = vmatprep.subr.mxu0 0.0
        %426 = vmatpush1.msra.mxu0 0.0
        %427 = vmatprep.subr.mxu0 0.0
        %428 = vmatpush1.msra.mxu0 0.0
        %429 = vmatprep.subr.mxu0 0.0
        %430 = vmatpush1.msra.mxu0 0.0
        %431 = vmatprep.subr.mxu0 0.0
        %432 = vmatpush1.msra.mxu0 0.0
        %433 = vmatprep.subr.mxu0 0.0
        %434 = vmatpush1.msra.mxu0 0.0
        %435 = vmatprep.subr.mxu0 0.0
        %436 = vmatpush1.msra.mxu0 0.0
        %437 = vmatprep.subr.mxu0 0.0
        %438 = vmatpush1.msra.mxu0 0.0
        %439 = vmatprep.subr.mxu0 0.0
        %440 = vmatpush1.msra.mxu0 0.0
        %441 = vmatprep.subr.mxu0 0.0
        %442 = vmatpush1.msra.mxu0 0.0
        %443 = vmatprep.subr.mxu0 0.0
        %444 = vmatpush1.msra.mxu0 0.0
        %445 = vmatprep.subr.mxu0 0.0
        %446 = vmatpush1.msra.mxu0 0.0
        %447 = vmatprep.subr.mxu0 0.0
        %448 = vmatpush1.msra.mxu0 0.0
        %449 = vmatprep.subr.mxu0 0.0
        %450 = vmatpush1.msra.mxu0 0.0
        %451 = vmatprep.subr.mxu0 0.0
        %452 = vmatpush1.msra.mxu0 0.0
        %453 = vmatprep.mubr.f32.mxu0 0.0
        %454 = vmatmul.mubr.f32.gmra.mrb[0].mxu0 %v387
        %v455 = vpop.f32.mrb[0].mxu0
        %v456 = vadd.f32 0.0, %v455
        %v457 = vpop.f32.mrb[0].mxu0
        %458 = vdwg.mxu0
        %v460 = vsel %vm312, %v310, 0
        %462 = vmatprep.subr.mxu0 0.0
        %463 = vmatpush1.msra.mxu0 %v304
        %464 = vmatprep.subr.mxu0 0.0
        %465 = vmatpush1.msra.mxu0 %v305
        %466 = vmatprep.subr.mxu0 0.0
        %467 = vmatpush1.msra.mxu0 0.0
        %468 = vmatprep.subr.mxu0 0.0
        %469 = vmatpush1.msra.mxu0 0.0
        %470 = vmatprep.subr.mxu0 0.0
        %471 = vmatpush1.msra.mxu0 0.0
        %472 = vmatprep.subr.mxu0 0.0
        %473 = vmatpush1.msra.mxu0 0.0
        %474 = vmatprep.subr.mxu0 0.0
        %475 = vmatpush1.msra.mxu0 0.0
        %476 = vmatprep.subr.mxu0 0.0
        %477 = vmatpush1.msra.mxu0 0.0
        %478 = vmatprep.subr.mxu0 0.0
        %479 = vmatpush1.msra.mxu0 0.0
        %480 = vmatprep.subr.mxu0 0.0
        %481 = vmatpush1.msra.mxu0 0.0
        %482 = vmatprep.subr.mxu0 0.0
        %483 = vmatpush1.msra.mxu0 0.0
        %484 = vmatprep.subr.mxu0 0.0
        %485 = vmatpush1.msra.mxu0 0.0
        %486 = vmatprep.subr.mxu0 0.0
        %487 = vmatpush1.msra.mxu0 0.0
        %488 = vmatprep.subr.mxu0 0.0
        %489 = vmatpush1.msra.mxu0 0.0
        %490 = vmatprep.subr.mxu0 0.0
        %491 = vmatpush1.msra.mxu0 0.0
        %492 = vmatprep.subr.mxu0 0.0
        %493 = vmatpush1.msra.mxu0 0.0
        %494 = vmatprep.subr.mxu0 0.0
        %495 = vmatpush1.msra.mxu0 0.0
        %496 = vmatprep.subr.mxu0 0.0
        %497 = vmatpush1.msra.mxu0 0.0
        %498 = vmatprep.subr.mxu0 0.0
        %499 = vmatpush1.msra.mxu0 0.0
        %500 = vmatprep.subr.mxu0 0.0
        %501 = vmatpush1.msra.mxu0 0.0
        %502 = vmatprep.subr.mxu0 0.0
        %503 = vmatpush1.msra.mxu0 0.0
        %504 = vmatprep.subr.mxu0 0.0
        %505 = vmatpush1.msra.mxu0 0.0
        %506 = vmatprep.subr.mxu0 0.0
        %507 = vmatpush1.msra.mxu0 0.0
        %508 = vmatprep.subr.mxu0 0.0
        %509 = vmatpush1.msra.mxu0 0.0
        %510 = vmatprep.subr.mxu0 0.0
        %511 = vmatpush1.msra.mxu0 0.0
        %512 = vmatprep.subr.mxu0 0.0
        %513 = vmatpush1.msra.mxu0 0.0
        %514 = vmatprep.subr.mxu0 0.0
        %515 = vmatpush1.msra.mxu0 0.0
        %516 = vmatprep.subr.mxu0 0.0
        %517 = vmatpush1.msra.mxu0 0.0
        %518 = vmatprep.subr.mxu0 0.0
        %519 = vmatpush1.msra.mxu0 0.0
        %520 = vmatprep.subr.mxu0 0.0
        %521 = vmatpush1.msra.mxu0 0.0
        %522 = vmatprep.subr.mxu0 0.0
        %523 = vmatpush1.msra.mxu0 0.0
        %524 = vmatprep.subr.mxu0 0.0
        %525 = vmatpush1.msra.mxu0 0.0
        %526 = vmatprep.mubr.f32.mxu0 0.0
        %527 = vmatmul.mubr.f32.gmra.mrb[0].mxu0 %v460
        %v528 = vpop.f32.mrb[0].mxu0
        %v529 = vadd.f32 0.0, %v528
        %v530 = vpop.f32.mrb[0].mxu0
        %531 = vdwg.mxu0
        %v533 = vsel %vm312, %v311, 0
        %535 = vmatprep.subr.mxu0 0.0
        %536 = vmatpush1.msra.mxu0 %v306
        %537 = vmatprep.subr.mxu0 0.0
        %538 = vmatpush1.msra.mxu0 %v307
        %539 = vmatprep.subr.mxu0 0.0
        %540 = vmatpush1.msra.mxu0 0.0
        %541 = vmatprep.subr.mxu0 0.0
        %542 = vmatpush1.msra.mxu0 0.0
        %543 = vmatprep.subr.mxu0 0.0
        %544 = vmatpush1.msra.mxu0 0.0
        %545 = vmatprep.subr.mxu0 0.0
        %546 = vmatpush1.msra.mxu0 0.0
        %547 = vmatprep.subr.mxu0 0.0
        %548 = vmatpush1.msra.mxu0 0.0
        %549 = vmatprep.subr.mxu0 0.0
        %550 = vmatpush1.msra.mxu0 0.0
        %551 = vmatprep.subr.mxu0 0.0
        %552 = vmatpush1.msra.mxu0 0.0
        %553 = vmatprep.subr.mxu0 0.0
        %554 = vmatpush1.msra.mxu0 0.0
        %555 = vmatprep.subr.mxu0 0.0
        %556 = vmatpush1.msra.mxu0 0.0
        %557 = vmatprep.subr.mxu0 0.0
        %558 = vmatpush1.msra.mxu0 0.0
        %559 = vmatprep.subr.mxu0 0.0
        %560 = vmatpush1.msra.mxu0 0.0
        %561 = vmatprep.subr.mxu0 0.0
        %562 = vmatpush1.msra.mxu0 0.0
        %563 = vmatprep.subr.mxu0 0.0
        %564 = vmatpush1.msra.mxu0 0.0
        %565 = vmatprep.subr.mxu0 0.0
        %566 = vmatpush1.msra.mxu0 0.0
        %567 = vmatprep.subr.mxu0 0.0
        %568 = vmatpush1.msra.mxu0 0.0
        %569 = vmatprep.subr.mxu0 0.0
        %570 = vmatpush1.msra.mxu0 0.0
        %571 = vmatprep.subr.mxu0 0.0
        %572 = vmatpush1.msra.mxu0 0.0
        %573 = vmatprep.subr.mxu0 0.0
        %574 = vmatpush1.msra.mxu0 0.0
        %575 = vmatprep.subr.mxu0 0.0
        %576 = vmatpush1.msra.mxu0 0.0
        %577 = vmatprep.subr.mxu0 0.0
        %578 = vmatpush1.msra.mxu0 0.0
        %579 = vmatprep.subr.mxu0 0.0
        %580 = vmatpush1.msra.mxu0 0.0
        %581 = vmatprep.subr.mxu0 0.0
        %582 = vmatpush1.msra.mxu0 0.0
        %583 = vmatprep.subr.mxu0 0.0
        %584 = vmatpush1.msra.mxu0 0.0
        %585 = vmatprep.subr.mxu0 0.0
        %586 = vmatpush1.msra.mxu0 0.0
        %587 = vmatprep.subr.mxu0 0.0
        %588 = vmatpush1.msra.mxu0 0.0
        %589 = vmatprep.subr.mxu0 0.0
        %590 = vmatpush1.msra.mxu0 0.0
        %591 = vmatprep.subr.mxu0 0.0
        %592 = vmatpush1.msra.mxu0 0.0
        %593 = vmatprep.subr.mxu0 0.0
        %594 = vmatpush1.msra.mxu0 0.0
        %595 = vmatprep.subr.mxu0 0.0
        %596 = vmatpush1.msra.mxu0 0.0
        %597 = vmatprep.subr.mxu0 0.0
        %598 = vmatpush1.msra.mxu0 0.0
        %599 = vmatprep.mubr.f32.mxu0 0.0
        %600 = vmatmul.mubr.f32.gmra.mrb[0].mxu0 %v533
        %v601 = vpop.f32.mrb[0].mxu0
        %v602 = vadd.f32 0.0, %v601
        %v603 = vpop.f32.mrb[0].mxu0
        %604 = vdwg.mxu0
        %605 = vst.msk [vmem:[#allocation2] sm:$0xff] %vm312, %v383
        %606 = vst.msk [vmem:[#allocation2 + $0x8] sm:$0xff] %vm312, %v456
        %607 = vst.msk [vmem:[#allocation2 + $0x10] sm:$0xff] %vm312, %v529
        %608 = vst.msk [vmem:[#allocation2 + $0x18] sm:$0xff] %vm312, %v602
        %p609 = scmp.eq.s32.totalorder %s26, 2
        // Predicated region
        $region41: #{tpu_custom_call.1} parent=27 // pred_check
          %p610 = pneg %p609
        $region42: #{tpu_custom_call.1} parent=27 // pred_check_branch
          %612 = sbr.rel (%p610) target = $region44
        $region43: #{tpu_custom_call.1} parent=27 // pred_region
          %v613 = vld [vmem:[#allocation2] sm:$0x1]
          %v614 = vld [vmem:[#allocation2 + $0x8] sm:$0x1]
          %v615 = vld [vmem:[#allocation2 + $0x10] sm:$0x1]
          %v616 = vld [vmem:[#allocation2 + $0x18] sm:$0x1]
          %v617 = vlaneseq
          %v618 = vand.u32 %v617, 127
          %vm619 = vcmp.ge.s32.totalorder %v618, 1
          %v620 = vsel %vm619, %v613, -3.4028235e+38
          %v621 = vsel %vm619, %v614, -3.4028235e+38
          %v622 = vsel %vm619, %v615, -3.4028235e+38
          %v623 = vsel %vm619, %v616, -3.4028235e+38
          %vm624 = vcmask 122880
          %v625 = vsel %vm624, %v620, -inf
          %626 = vmax.xlane.f32.xlu0 %v625
          %v627 = vpop.xlane.xlu0 %626
          %v628 = vsel %vm624, %v621, -inf
          %629 = vmax.xlane.f32.xlu0 %v628
          %v630 = vpop.xlane.xlu0 %629
          %v631 = vsel %vm624, %v622, -inf
          %632 = vmax.xlane.f32.xlu0 %v631
          %v633 = vpop.xlane.xlu0 %632
          %v634 = vsel %vm624, %v623, -inf
          %635 = vmax.xlane.f32.xlu0 %v634
          %v636 = vpop.xlane.xlu0 %635
          %vm637 = vcmp.eq.f32.partialorder %v620, %v627
          %vm638 = vcmp.eq.f32.partialorder %v621, %v630
          %vm639 = vcmp.eq.f32.partialorder %v622, %v633
          %vm640 = vcmp.eq.f32.partialorder %v623, %v636
          %v641 = vsel %vm637, %v618, 16
          %v642 = vsel %vm638, %v618, 16
          %v643 = vsel %vm639, %v618, 16
          %v644 = vsel %vm640, %v618, 16
          %v645 = vsel %vm624, %v641, 2147483647
          %v646 = vand.u32 %v645, 65535
          %v647 = vshra.s32 %v645, 16
          %v648 = vcvt.s32.f32 %v646
          %v649 = vcvt.s32.f32 %v647
          %650 = vmin.xlane.f32.xlu0 %v649
          %v651 = vpop.xlane.xlu0 %650
          %vm652 = vcmp.eq.f32.partialorder %v649, %v651
          %v653 = vsel %vm652, %v648, inf
          %654 = vmin.xlane.f32.xlu0 %v653
          %v655 = vpop.xlane.xlu0 %654
          %v656 = vcvt.f32.s32 %v655
          %v657 = vcvt.f32.s32 %v651
          %v658 = vshll.u32 %v657, 16
          %v659 = vadd.s32 %v658, %v656
          %v660 = vsel %vm624, %v642, 2147483647
          %v661 = vand.u32 %v660, 65535
          %v662 = vshra.s32 %v660, 16
          %v663 = vcvt.s32.f32 %v661
          %v664 = vcvt.s32.f32 %v662
          %665 = vmin.xlane.f32.xlu0 %v664
          %v666 = vpop.xlane.xlu0 %665
          %vm667 = vcmp.eq.f32.partialorder %v664, %v666
          %v668 = vsel %vm667, %v663, inf
          %669 = vmin.xlane.f32.xlu0 %v668
          %v670 = vpop.xlane.xlu0 %669
          %v671 = vcvt.f32.s32 %v670
          %v672 = vcvt.f32.s32 %v666
          %v673 = vshll.u32 %v672, 16
          %v674 = vadd.s32 %v673, %v671
          %v675 = vsel %vm624, %v643, 2147483647
          %v676 = vand.u32 %v675, 65535
          %v677 = vshra.s32 %v675, 16
          %v678 = vcvt.s32.f32 %v676
          %v679 = vcvt.s32.f32 %v677
          %680 = vmin.xlane.f32.xlu0 %v679
          %v681 = vpop.xlane.xlu0 %680
          %vm682 = vcmp.eq.f32.partialorder %v679, %v681
          %v683 = vsel %vm682, %v678, inf
          %684 = vmin.xlane.f32.xlu0 %v683
          %v685 = vpop.xlane.xlu0 %684
          %v686 = vcvt.f32.s32 %v685
          %v687 = vcvt.f32.s32 %v681
          %v688 = vshll.u32 %v687, 16
          %v689 = vadd.s32 %v688, %v686
          %v690 = vsel %vm624, %v644, 2147483647
          %v691 = vand.u32 %v690, 65535
          %v692 = vshra.s32 %v690, 16
          %v693 = vcvt.s32.f32 %v691
          %v694 = vcvt.s32.f32 %v692
          %695 = vmin.xlane.f32.xlu0 %v694
          %v696 = vpop.xlane.xlu0 %695
          %vm697 = vcmp.eq.f32.partialorder %v694, %v696
          %v698 = vsel %vm697, %v693, inf
          %699 = vmin.xlane.f32.xlu0 %v698
          %v700 = vpop.xlane.xlu0 %699
          %v701 = vcvt.f32.s32 %v700
          %v702 = vcvt.f32.s32 %v696
          %v703 = vshll.u32 %v702, 16
          %v704 = vadd.s32 %v703, %v701
          %v705 = vsub.s32 %v659, 1
          %v706 = vsub.s32 %v674, 1
          %v707 = vsub.s32 %v689, 1
          %v708 = vsub.s32 %v704, 1
          %v713 = vrot.slane %v630, 7
          %vm714 = vcmask 1041409
          %v715 = vsel %vm714, %v713, %v627
          %v716 = vrot.slane %v633, 6
          %vm717 = vcmask 1042434
          %v718 = vsel %vm717, %v716, %v715
          %v719 = vrot.slane %v636, 5
          %vm720 = vcmask 1043459
          %v721 = vsel %vm720, %v719, %v718
          %vm723 = vcmask 3072
          %724 = vst.msk [vmem:[%s258] sm:$0xf] %vm723, %v721
          %v725 = vrot.slane %v706, 7
          %v726 = vsel %vm714, %v725, %v705
          %v727 = vrot.slane %v707, 6
          %v728 = vsel %vm717, %v727, %v726
          %v729 = vrot.slane %v708, 5
          %v730 = vsel %vm720, %v729, %v728
          %731 = vst.msk [vmem:[%s262] sm:$0xf] %vm723, %v730
        $region44: #{tpu_custom_call.1} parent=27 // pred_fallthru
          _
        %p732 = scmp.lt.s32.totalorder %s25, 1
        %s733 = scalar_select %p732, %s25, 1
        %s734 = smul.addr %s733, 4
        %s735 = scalar_lea.vmem %s2, %s734
        %p736 = scmp.lt.s32.totalorder %s25, 1
        %s737 = scalar_select %p736, %s25, 1
        %s738 = smul.addr %s737, 4
        %s739 = scalar_lea.vmem %s3, %s738
        // Predicated region
        $region45: #{tpu_custom_call.1} parent=27 // pred_check
          %p740 = pneg %p107
        $region46: #{tpu_custom_call.1} parent=27 // pred_check_branch
          %742 = sbr.rel (%p740) target = $region48
        $region47: #{tpu_custom_call.1} parent=27 // pred_region
          _
        $region48: #{tpu_custom_call.1} parent=27 // pred_fallthru
          _
        // Predicated region
        $region49: #{tpu_custom_call.1} parent=27 // pred_check
          %p743 = pneg %p133
        $region50: #{tpu_custom_call.1} parent=27 // pred_check_branch
          %745 = sbr.rel (%p743) target = $region52
        $region51: #{tpu_custom_call.1} parent=27 // pred_region
          _
        $region52: #{tpu_custom_call.1} parent=27 // pred_fallthru
          _
      $region28: #{tpu_custom_call.1} parent=5 // pred_fallthru
        _
      %p746 = scmp.le.s32.totalorder 2, %s16
      // Predicated region
      $region53: #{tpu_custom_call.1} parent=5 // pred_check
        %p747 = pneg %p746
      $region54: #{tpu_custom_call.1} parent=5 // pred_check_branch
        %749 = sbr.rel (%p747) target = $region56
      $region55: #{tpu_custom_call.1} parent=5 // pred_region
        %s750 = ssub.s32 %s16, 2
        // Predicated region
        $region57: #{tpu_custom_call.1} parent=55 // pred_check
          %p751 = pneg %p113
        $region58: #{tpu_custom_call.1} parent=55 // pred_check_branch
          %753 = sbr.rel (%p751) target = $region60
        $region59: #{tpu_custom_call.1} parent=55 // pred_region
          %p754 = scmp.lt.s32.totalorder %s27, 1
          %s755 = scalar_select %p754, %s27, 1
          %s756 = smul.addr %s755, 4
          %s757 = scalar_lea.vmem %s2, %s756
        $region60: #{tpu_custom_call.1} parent=55 // pred_fallthru
          _
        // Predicated region
        $region61: #{tpu_custom_call.1} parent=55 // pred_check
          %p758 = pneg %p139
        $region62: #{tpu_custom_call.1} parent=55 // pred_check_branch
          %760 = sbr.rel (%p758) target = $region64
        $region63: #{tpu_custom_call.1} parent=55 // pred_region
          %p761 = scmp.lt.s32.totalorder %s27, 1
          %s762 = scalar_select %p761, %s27, 1
          %s763 = smul.addr %s762, 4
          %s764 = scalar_lea.vmem %s3, %s763
        $region64: #{tpu_custom_call.1} parent=55 // pred_fallthru
          _
      $region56: #{tpu_custom_call.1} parent=5 // pred_fallthru
        _
    $region6: #{tpu_custom_call.1} parent=1 // loop_footer
      %s20 = sadd.s32 1, %s16
    $region7: #{tpu_custom_call.1} parent=1 // loop_footer_branch
      %15 = sbr.rel target = $region3
    $region8: #{tpu_custom_call.1} parent=1 // loop_exit
      _
    %765 = vsyncpa [#allocation4], 1
    %s766 = scalar_lea.sflag [#allocation4], 1
    %767 = vsyncpa %s766, 1
    %768 = vsyncpa [#allocation6], 1
    %s769 = scalar_lea.sflag [#allocation6], 1
    %770 = vsyncpa %s769, 1

</llo_original>
